<compile_context>
chip_gen: v7x
topology: tpu7x:2x2x1
jax: 0.10.0
libtpu: 0.0.40
codegen_flags: <defaults>
</compile_context>

<pallas_src>
import functools

import jax
import jax.numpy as jnp
from jax.experimental import pallas as pl
from jax.experimental.pallas import tpu as pltpu

_LANES = 128
_SUBLANES = 8
_MAX_BLOCK_ROWS = 4096  # (4096, 128) f32 = 2 MiB per buffer; safe on all generations.


def _round_up(a, b):
    return (a + b - 1) // b * b


def _partial_ssq_kernel(x_ref, t_ref, out_ref, *, total_rows, mask_tail):
    """Per-grid-step partial sum of squared differences.

    Each grid step is independent: it reduces its (block_rows, 128) tile to an
    (8, 128) vreg-shaped partial written to its own output slot.  No serial
    scalar accumulator, no per-step cross-lane reduce.
    """
    x = x_ref[...].astype(jnp.float32)
    t = t_ref[...].astype(jnp.float32)
    d = x - t
    if mask_tail:
        # Last block may extend past the array: rows >= total_rows are OOB garbage.
        i = pl.program_id(0)
        block_rows = x_ref.shape[0]
        row = jax.lax.broadcasted_iota(jnp.int32, d.shape, 0)
        d = jnp.where(i * block_rows + row < total_rows, d, 0.0)
    sq = d * d
    # (block_rows, 128) -> (1, block_rows//8, 8, 128); summing axis=1 is pure
    # sublane-aligned vreg adds on the VPU (no XLU work in the hot loop).
    out_ref[...] = sq.reshape(1, -1, _SUBLANES, _LANES).sum(axis=1)


def _sum_sq_diff(x2d, t2d):
    rows = x2d.shape[0]
    block_rows = min(_MAX_BLOCK_ROWS, _round_up(rows, _SUBLANES))
    grid = pl.cdiv(rows, block_rows)
    mask_tail = (rows % block_rows) != 0

    kernel = functools.partial(
        _partial_ssq_kernel, total_rows=rows, mask_tail=mask_tail
    )
    bytes_in = 2 * rows * _LANES * x2d.dtype.itemsize
    partials = pl.pallas_call(
        kernel,
        out_shape=jax.ShapeDtypeStruct((grid, _SUBLANES, _LANES), jnp.float32),
        grid=(grid,),
        in_specs=[
            pl.BlockSpec((block_rows, _LANES), lambda i: (i, 0)),
            pl.BlockSpec((block_rows, _LANES), lambda i: (i, 0)),
        ],
        out_specs=pl.BlockSpec((1, _SUBLANES, _LANES), lambda i: (i, 0, 0)),
        compiler_params=pltpu.CompilerParams(
            dimension_semantics=("parallel",),
        ),
        cost_estimate=pl.CostEstimate(
            flops=3 * rows * _LANES,
            transcendentals=0,
            bytes_accessed=bytes_in + grid * _SUBLANES * _LANES * 4,
        ),
    )(x2d, t2d)
    # Tiny (grid, 8, 128) final reduce + mean in XLA.
    return jnp.sum(partials)


@jax.jit
def content_loss_forward(x, target):
    """Mirrors ContentLoss.forward: loss = mse_loss(x, target); returns (x, loss)."""
    assert x.shape == target.shape, "input and target must have the same shape"
    n = x.size

    xf = x.reshape(-1)        # native dtype; cast to f32 inside the kernel
    tf = target.reshape(-1)

    # Only pad when the element count is not lane-aligned (zeros contribute 0).
    pad = (-n) % _LANES
    if pad:
        xf = jnp.pad(xf, (0, pad))
        tf = jnp.pad(tf, (0, pad))

    rows = (n + pad) // _LANES
    ssq = _sum_sq_diff(xf.reshape(rows, _LANES), tf.reshape(rows, _LANES))
    loss = ssq / jnp.float32(n)  # mean over the true element count
    return x, loss


if __name__ == "__main__":
    key = jax.random.PRNGKey(0)
    k1, k2 = jax.random.split(key)

    # Small NCHW shapes consistent with the module's image-content use case.
    x = jax.random.normal(k1, (2, 4, 16, 16), dtype=jnp.float32)
    target = jax.random.normal(k2, (2, 4, 16, 16), dtype=jnp.float32)

    out, loss = content_loss_forward(x, target)
    jax.block_until_ready((out, loss))

    # Reference check against plain JAX MSE.
    ref_loss = jnp.mean((x - target) ** 2)
    assert jnp.allclose(loss, ref_loss, rtol=1e-5, atol=1e-6), (loss, ref_loss)
    # Forward returns the input unchanged (passthrough).
    assert jnp.array_equal(out, x)

    print("KERNEL_OK")
</pallas_src>

<mosaic_0001>
module attributes {stable_mosaic.version = 11 : i64} {
  func.func @_partial_ssq_kernel(%arg0: i32, %arg1: memref<16x128xf32, #tpu.memory_space<vmem>>, %arg2: memref<16x128xf32, #tpu.memory_space<vmem>>, %arg3: memref<1x8x128xf32, #tpu.memory_space<vmem>>) attributes {dimension_semantics = [#tpu.dimension_semantics<parallel>], iteration_bounds = array<i64: 1>, scalar_prefetch = 0 : i64, scratch_operands = 0 : i64, tpu.core_type = #tpu.core_type<tc>, window_params = [{transform_indices = @transform_0, window_bounds = array<i64: 16, 128>}, {transform_indices = @transform_1, window_bounds = array<i64: 16, 128>}, {transform_indices = @transform_2, window_bounds = array<i64: 1, 8, 128>}]} {
    %c0 = arith.constant 0 : index
    %c0_0 = arith.constant 0 : index
    %0 = vector.load %arg1[%c0, %c0_0] : memref<16x128xf32, #tpu.memory_space<vmem>>, vector<16x128xf32>
    %c0_1 = arith.constant 0 : index
    %c0_2 = arith.constant 0 : index
    %1 = vector.load %arg2[%c0_1, %c0_2] : memref<16x128xf32, #tpu.memory_space<vmem>>, vector<16x128xf32>
    %2 = arith.subf %0, %1 : vector<16x128xf32>
    %3 = arith.mulf %2, %2 : vector<16x128xf32>
    %4 = vector.shape_cast %3 : vector<16x128xf32> to vector<1x2x8x128xf32>
    %cst = arith.constant dense<0.000000e+00> : vector<1x8x128xf32>
    %5 = vector.multi_reduction <add>, %4, %cst [1] : vector<1x2x8x128xf32> to vector<1x8x128xf32>
    %c0_3 = arith.constant 0 : index
    %c0_4 = arith.constant 0 : index
    %c0_5 = arith.constant 0 : index
    %6 = vector.load %arg3[%c0_3, %c0_4, %c0_5] : memref<1x8x128xf32, #tpu.memory_space<vmem>>, vector<1x8x128xf32>
    tpu.vector_store %arg3[%c0_3, %c0_4, %c0_5], %5 {strides = array<i32>} : memref<1x8x128xf32, #tpu.memory_space<vmem>>, vector<1x8x128xf32>,
    return
  }
  func.func @transform_0(%arg0: i32) -> (i32, i32) {
    %c0_i32 = arith.constant 0 : i32
    %c0_i32_0 = arith.constant 0 : i32
    return %arg0, %c0_i32 : i32, i32
  }
  func.func @transform_1(%arg0: i32) -> (i32, i32) {
    %c0_i32 = arith.constant 0 : i32
    %c0_i32_0 = arith.constant 0 : i32
    return %arg0, %c0_i32 : i32, i32
  }
  func.func @transform_2(%arg0: i32) -> (i32, i32, i32) {
    %c0_i32 = arith.constant 0 : i32
    %c0_i32_0 = arith.constant 0 : i32
    %c0_i32_1 = arith.constant 0 : i32
    return %arg0, %c0_i32, %c0_i32_0 : i32, i32, i32
  }
}

</mosaic_0001>

<llo_original>
// kernel: content_loss_forward.1
$region0: #{content_loss_forward.1}
  #allocation0 [shape = 'u32[]', space=smem, size = 0x4, offset = 0x4, fixed_abs, tag = 'smem constant byte address 0x4 - core index']
  #allocation1 [shape = 'u32[144,128]{1,0:T(1,128)}', space=vmem, size = 0x12000, scoped, tag = 'internal scratch']
  %s0 = inlined_call_operand.vmem [shape: f32[16,128], index: 0, kind: input, shape index: {}]
  %s1 = inlined_call_operand.vmem [shape: f32[16,128], index: 1, kind: input, shape index: {}]
  %s2 = inlined_call_operand.vmem [shape: f32[1,8,128], index: 2, kind: output, shape index: {}]
  %s3 = sld [smem:[#allocation0]]
  $region18: #{content_loss_forward.1} parent=0
    _
  %s5 = ssub.s32 1, %s3
  %s6 = scalar_select 0, %s5, %s3
  // Predicated region
  $region2: #{content_loss_forward.1} parent=0 // pred_check
    _
  $region3: #{content_loss_forward.1} parent=0 // pred_check_branch
    %8 = sbr.rel (0) target = $region5
  $region4: #{content_loss_forward.1} parent=0 // pred_region
    _
  $region5: #{content_loss_forward.1} parent=0 // pred_fallthru
    _
  // Predicated region
  $region6: #{content_loss_forward.1} parent=0 // pred_check
    _
  $region7: #{content_loss_forward.1} parent=0 // pred_check_branch
    %10 = sbr.rel (0) target = $region9
  $region8: #{content_loss_forward.1} parent=0 // pred_region
    _
  $region9: #{content_loss_forward.1} parent=0 // pred_fallthru
    _
  %v11 = vld [vmem:[%s0] sm:$0xff]
  %v12 = vld [vmem:[%s0 + $0x8] sm:$0xff]
  %v13 = vld [vmem:[%s1] sm:$0xff]
  %v14 = vld [vmem:[%s1 + $0x8] sm:$0xff]
  %v15 = vsub.f32 %v11, %v13
  %v16 = vsub.f32 %v12, %v14
  %v17 = vmul.f32 %v15, %v15
  %v18 = vmul.f32 %v16, %v16
  %v19 = vadd.f32 %v17, %v18
  %20 = vst [vmem:[%s2] sm:$0xff] %v19
  // Predicated region
  $region10: #{content_loss_forward.1} parent=0 // pred_check
    _
  $region11: #{content_loss_forward.1} parent=0 // pred_check_branch
    %22 = sbr.rel (0) target = $region13
  $region12: #{content_loss_forward.1} parent=0 // pred_region
    _
  $region13: #{content_loss_forward.1} parent=0 // pred_fallthru
    _
  // Predicated region
  $region14: #{content_loss_forward.1} parent=0 // pred_check
    _
  $region15: #{content_loss_forward.1} parent=0 // pred_check_branch
    %24 = sbr.rel (0) target = $region17
  $region16: #{content_loss_forward.1} parent=0 // pred_region
    _
  $region17: #{content_loss_forward.1} parent=0 // pred_fallthru
    _

</llo_original>
